<compile_context>
chip_gen: v7x
topology: tpu7x:2x2x1
jax: 0.10.0
libtpu: 0.0.40
codegen_flags: <defaults>
</compile_context>

<pallas_src>
import functools

import jax
import jax.numpy as jnp
from jax.experimental import pallas as pl
from jax.experimental.pallas import tpu as pltpu


def _gated(x, w1, w3, activation):
    """act(x @ w1) * (x @ w3), accumulated in f32 on the MXU."""
    h1 = jnp.dot(x, w1, preferred_element_type=jnp.float32)
    h3 = jnp.dot(x, w3, preferred_element_type=jnp.float32)
    if activation == "silu":
        act = h1 * jax.nn.sigmoid(h1)      # EUP sigmoid, VPU mul
    elif activation == "tanh":
        act = jnp.tanh(h1)
    else:
        raise Exception("incorrect activation selection")
    return act * h3


def _ffn_kernel_single(x_ref, w1_ref, w3_ref, w2_ref, o_ref, *, activation):
    # Hidden dimension fits in one tile: no scratch accumulator needed.
    gated = _gated(x_ref[...], w1_ref[...], w3_ref[...],
                   activation).astype(w2_ref.dtype)
    o_ref[...] = jnp.dot(gated, w2_ref[...],
                         preferred_element_type=jnp.float32).astype(o_ref.dtype)


def _ffn_kernel_acc(x_ref, w1_ref, w3_ref, w2_ref, o_ref, acc_ref, *, activation):
    # x_ref:  (tm, dim)   token tile (resident across h steps)
    # w1_ref: (dim, th)   hidden-chunk of w1^T
    # w3_ref: (dim, th)   hidden-chunk of w3^T
    # w2_ref: (th, dim)   hidden-chunk of w2^T
    # acc_ref:(tm, dim)   f32 output accumulator (persists across h steps)
    h_idx = pl.program_id(1)

    @pl.when(h_idx == 0)
    def _():
        acc_ref[...] = jnp.zeros_like(acc_ref)

    gated = _gated(x_ref[...], w1_ref[...], w3_ref[...],
                   activation).astype(w2_ref.dtype)
    acc_ref[...] += jnp.dot(gated, w2_ref[...],
                            preferred_element_type=jnp.float32)

    @pl.when(h_idx == pl.num_programs(1) - 1)
    def _():
        o_ref[...] = acc_ref[...].astype(o_ref.dtype)


def _round_up(n, m):
    return ((n + m - 1) // m) * m


def _maybe_pad2d(a, rows, cols):
    pr, pc = rows - a.shape[0], cols - a.shape[1]
    if pr == 0 and pc == 0:
        return a
    return jnp.pad(a, ((0, pr), (0, pc)))


def _estimate_vmem(tm, th, dim_p, itemsize):
    # Double-buffered inputs/outputs + f32 accumulator scratch.
    x_b = 2 * tm * dim_p * itemsize
    w_b = 2 * 3 * dim_p * th * itemsize
    o_b = 2 * tm * dim_p * itemsize
    acc_b = tm * dim_p * 4
    return x_b + w_b + o_b + acc_b


def feed_forward(x, w1t, w3t, w2t, *, activation="silu", tm=512, th=1024,
                 vmem_budget_bytes=56 << 20, vmem_limit_bytes=None):
    """x: (batch, seq, dim); w1t/w3t: (dim, hidden); w2t: (hidden, dim).

    tm: token-tile rows (multiple of 8). 512 amortizes weight streaming.
    th: requested hidden-tile width (multiple of 128); auto-shrunk to fit
        `vmem_budget_bytes` (default is v7x-safe; raise on v5e/v6e).
    """
    batch, seq, dim = x.shape
    hidden = w1t.shape[1]
    M = batch * seq
    itemsize = jnp.dtype(x.dtype).itemsize

    # Clamp token tile for small problems.
    tm_eff = min(tm, _round_up(M, 8))

    # Lane-dense padded dims.
    dim_p = _round_up(dim, 128)

    # Hidden tile: start at min(th, hidden rounded up), halve until the
    # double-buffered working set fits the VMEM budget.
    th_eff = min(_round_up(th, 128), _round_up(hidden, 128))
    while th_eff > 128 and _estimate_vmem(tm_eff, th_eff, dim_p,
                                          itemsize) > vmem_budget_bytes:
        th_eff = max(128, (th_eff // 2 // 128) * 128)

    hid_p = _round_up(hidden, th_eff)
    m_p = _round_up(M, tm_eff)

    x2d = _maybe_pad2d(x.reshape(M, dim), m_p, dim_p)
    w1p = _maybe_pad2d(w1t, dim_p, hid_p)
    w3p = _maybe_pad2d(w3t, dim_p, hid_p)
    w2p = _maybe_pad2d(w2t, hid_p, dim_p)

    grid = (m_p // tm_eff, hid_p // th_eff)
    single_h = grid[1] == 1

    if single_h:
        kernel = functools.partial(_ffn_kernel_single, activation=activation)
        scratch_shapes = []
    else:
        kernel = functools.partial(_ffn_kernel_acc, activation=activation)
        scratch_shapes = [pltpu.VMEM((tm_eff, dim_p), jnp.float32)]

    est_vmem = _estimate_vmem(tm_eff, th_eff, dim_p, itemsize)
    if vmem_limit_bytes is None:
        vmem_limit_bytes = int(min(100 << 20, max(32 << 20, est_vmem + (4 << 20))))

    # Advisory cost estimate for XLA scheduling around the custom call.
    flops = 2 * M * dim * hidden * 3
    transcendentals = M * hidden
    bytes_accessed = (x2d.size + w1p.size + w3p.size + w2p.size
                      + m_p * dim_p) * itemsize
    cost = pl.CostEstimate(flops=int(flops),
                           transcendentals=int(transcendentals),
                           bytes_accessed=int(bytes_accessed))

    out2d = pl.pallas_call(
        kernel,
        out_shape=jax.ShapeDtypeStruct((m_p, dim_p), x.dtype),
        grid_spec=pltpu.PrefetchScalarGridSpec(
            num_scalar_prefetch=0,
            grid=grid,
            in_specs=[
                pl.BlockSpec((tm_eff, dim_p), lambda i, h: (i, 0)),  # x tile
                pl.BlockSpec((dim_p, th_eff), lambda i, h: (0, h)),  # w1^T chunk
                pl.BlockSpec((dim_p, th_eff), lambda i, h: (0, h)),  # w3^T chunk
                pl.BlockSpec((th_eff, dim_p), lambda i, h: (h, 0)),  # w2^T chunk
            ],
            out_specs=pl.BlockSpec((tm_eff, dim_p), lambda i, h: (i, 0)),
            scratch_shapes=scratch_shapes,
        ),
        compiler_params=pltpu.CompilerParams(
            dimension_semantics=("parallel", "arbitrary"),
            vmem_limit_bytes=vmem_limit_bytes,
        ),
        cost_estimate=cost,
    )(x2d, w1p, w3p, w2p)

    if m_p == M and dim_p == dim:
        return out2d.reshape(batch, seq, dim)
    return out2d[:M, :dim].reshape(batch, seq, dim)


def compute_hidden_dim(dim, hidden_dim, multiple_of, ffn_dim_multiplier):
    hidden_dim = int(2 * hidden_dim / 3)
    if ffn_dim_multiplier is not None:
        hidden_dim = int(ffn_dim_multiplier * hidden_dim)
    hidden_dim = multiple_of * ((hidden_dim + multiple_of - 1) // multiple_of)
    return hidden_dim


if __name__ == "__main__":
    # Module hyperparameters (small, consistent with the forward pass).
    dim = 32
    raw_hidden_dim = 4 * dim          # typical transformer setting
    multiple_of = 32
    ffn_dim_multiplier = None
    activation = "silu"

    hidden = compute_hidden_dim(dim, raw_hidden_dim, multiple_of,
                                ffn_dim_multiplier)   # -> 96

    batch, seq = 2, 8

    key = jax.random.PRNGKey(0)
    kx, k1, k2, k3 = jax.random.split(key, 4)

    x = jax.random.normal(kx, (batch, seq, dim), dtype=jnp.float32)

    # PyTorch nn.Linear(in, out) weight has shape (out, in); store transposed
    # (in, out) so the kernel does y = x @ W^T directly.
    scale = 1.0 / (dim ** 0.5)
    w1t = jax.random.normal(k1, (dim, hidden), dtype=jnp.float32) * scale
    w3t = jax.random.normal(k3, (dim, hidden), dtype=jnp.float32) * scale
    w2t = (jax.random.normal(k2, (hidden, dim), dtype=jnp.float32)
           * (1.0 / (hidden ** 0.5)))

    out = feed_forward(x, w1t, w3t, w2t, activation=activation)
    jax.block_until_ready(out)

    # Pure-JAX reference check of the same math.
    h1 = x @ w1t
    h3 = x @ w3t
    ref = (h1 * jax.nn.sigmoid(h1) * h3) @ w2t
    assert out.shape == (batch, seq, dim)
    assert jnp.allclose(out, ref, atol=1e-4, rtol=1e-4)

    # Also exercise the multi-hidden-tile (accumulator) path with a forced
    # small hidden tile, to keep both code paths verified.
    out_acc = feed_forward(x, w1t, w3t, w2t, activation=activation, th=128,
                           vmem_budget_bytes=1 << 20)
    jax.block_until_ready(out_acc)
    assert jnp.allclose(out_acc, ref, atol=1e-4, rtol=1e-4)

    print("KERNEL_OK")
</pallas_src>

<mosaic_0001>
module attributes {stable_mosaic.version = 11 : i64} {
  func.func @_ffn_kernel_single(%arg0: i32, %arg1: i32, %arg2: memref<16x128xf32, #tpu.memory_space<vmem>>, %arg3: memref<128x128xf32, #tpu.memory_space<vmem>>, %arg4: memref<128x128xf32, #tpu.memory_space<vmem>>, %arg5: memref<128x128xf32, #tpu.memory_space<vmem>>, %arg6: memref<16x128xf32, #tpu.memory_space<vmem>>) attributes {dimension_semantics = [#tpu.dimension_semantics<parallel>, #tpu.dimension_semantics<arbitrary>], iteration_bounds = array<i64: 1, 1>, scalar_prefetch = 0 : i64, scratch_operands = 0 : i64, tpu.core_type = #tpu.core_type<tc>, window_params = [{transform_indices = @transform_0, window_bounds = array<i64: 16, 128>}, {transform_indices = @transform_1, window_bounds = array<i64: 128, 128>}, {transform_indices = @transform_2, window_bounds = array<i64: 128, 128>}, {transform_indices = @transform_3, window_bounds = array<i64: 128, 128>}, {transform_indices = @transform_4, window_bounds = array<i64: 16, 128>}]} {
    %c0 = arith.constant 0 : index
    %c0_0 = arith.constant 0 : index
    %0 = vector.load %arg2[%c0, %c0_0] : memref<16x128xf32, #tpu.memory_space<vmem>>, vector<16x128xf32>
    %c0_1 = arith.constant 0 : index
    %c0_2 = arith.constant 0 : index
    %1 = vector.load %arg3[%c0_1, %c0_2] : memref<128x128xf32, #tpu.memory_space<vmem>>, vector<128x128xf32>
    %c0_3 = arith.constant 0 : index
    %c0_4 = arith.constant 0 : index
    %2 = vector.load %arg4[%c0_3, %c0_4] : memref<128x128xf32, #tpu.memory_space<vmem>>, vector<128x128xf32>
    %cst = arith.constant dense<0.000000e+00> : vector<16x128xf32>
    %3 = tpu.matmul %0, %1, %cst {dimension_numbers = #tpu.dot_dimension_numbers<[1], [0], [0], [1], [0, 0, 1, 1], [], []>} : vector<16x128xf32>, vector<128x128xf32>, vector<16x128xf32> -> vector<16x128xf32>
    %cst_5 = arith.constant dense<0.000000e+00> : vector<16x128xf32>
    %4 = tpu.matmul %0, %2, %cst_5 {dimension_numbers = #tpu.dot_dimension_numbers<[1], [0], [0], [1], [0, 0, 1, 1], [], []>} : vector<16x128xf32>, vector<128x128xf32>, vector<16x128xf32> -> vector<16x128xf32>
    %5 = arith.negf %3 : vector<16x128xf32>
    %6 = math.exp %5 : vector<16x128xf32>
    %cst_6 = arith.constant 1.000000e+00 : f32
    %7 = vector.broadcast %cst_6 : f32 to vector<16x128xf32>
    %8 = arith.addf %7, %6 : vector<16x128xf32>
    %9 = arith.divf %7, %8 : vector<16x128xf32>
    %10 = arith.mulf %3, %9 : vector<16x128xf32>
    %11 = arith.mulf %10, %4 : vector<16x128xf32>
    %c0_7 = arith.constant 0 : index
    %c0_8 = arith.constant 0 : index
    %12 = vector.load %arg5[%c0_7, %c0_8] : memref<128x128xf32, #tpu.memory_space<vmem>>, vector<128x128xf32>
    %cst_9 = arith.constant dense<0.000000e+00> : vector<16x128xf32>
    %13 = tpu.matmul %11, %12, %cst_9 {dimension_numbers = #tpu.dot_dimension_numbers<[1], [0], [0], [1], [0, 0, 1, 1], [], []>} : vector<16x128xf32>, vector<128x128xf32>, vector<16x128xf32> -> vector<16x128xf32>
    %c0_10 = arith.constant 0 : index
    %c0_11 = arith.constant 0 : index
    %14 = vector.load %arg6[%c0_10, %c0_11] : memref<16x128xf32, #tpu.memory_space<vmem>>, vector<16x128xf32>
    tpu.vector_store %arg6[%c0_10, %c0_11], %13 {strides = array<i32>} : memref<16x128xf32, #tpu.memory_space<vmem>>, vector<16x128xf32>,
    return
  }
  func.func @transform_0(%arg0: i32, %arg1: i32) -> (i32, i32) {
    %c0_i32 = arith.constant 0 : i32
    %c0_i32_0 = arith.constant 0 : i32
    return %arg0, %c0_i32 : i32, i32
  }
  func.func @transform_1(%arg0: i32, %arg1: i32) -> (i32, i32) {
    %c0_i32 = arith.constant 0 : i32
    %c0_i32_0 = arith.constant 0 : i32
    return %c0_i32, %arg1 : i32, i32
  }
  func.func @transform_2(%arg0: i32, %arg1: i32) -> (i32, i32) {
    %c0_i32 = arith.constant 0 : i32
    %c0_i32_0 = arith.constant 0 : i32
    return %c0_i32, %arg1 : i32, i32
  }
  func.func @transform_3(%arg0: i32, %arg1: i32) -> (i32, i32) {
    %c0_i32 = arith.constant 0 : i32
    %c0_i32_0 = arith.constant 0 : i32
    return %arg1, %c0_i32 : i32, i32
  }
  func.func @transform_4(%arg0: i32, %arg1: i32) -> (i32, i32) {
    %c0_i32 = arith.constant 0 : i32
    %c0_i32_0 = arith.constant 0 : i32
    return %arg0, %c0_i32 : i32, i32
  }
}

</mosaic_0001>

<llo_original>
// kernel: tpu_custom_call.1
$region0: #{tpu_custom_call.1}
  #allocation0 [shape = 'u32[]', space=smem, size = 0x4, offset = 0x4, fixed_abs, tag = 'smem constant byte address 0x4 - core index']
  #allocation1 [shape = 'u32[144,128]{1,0:T(1,128)}', space=vmem, size = 0x12000, scoped, tag = 'internal scratch']
  %s0 = inlined_call_operand.hbm [shape: f32[16,128], index: 0, kind: input, shape index: {}]
  %s1 = inlined_call_operand.hbm [shape: f32[128,128], index: 1, kind: input, shape index: {}]
  %s2 = inlined_call_operand.hbm [shape: f32[128,128], index: 2, kind: input, shape index: {}]
  %s3 = inlined_call_operand.hbm [shape: f32[128,128], index: 3, kind: input, shape index: {}]
  %s4 = inlined_call_operand.hbm [shape: f32[16,128], index: 4, kind: output, shape index: {}]
  %s5 = sld [smem:[#allocation0]]
  $region42: #{tpu_custom_call.1} parent=0
    _
  %s7 = ssub.s32 1, %s5
  %s8 = scalar_select 0, %s7, %s5
  $region1: #{tpu_custom_call.1} parent=0
    #allocation2 [shape = 'u8[8192]{0}', space=vmem, size = 0x2000, scoped, tag = 'input window, operand 0, single buffered']
    #allocation3 [shape = 's32[1]{0}', space=sflag, size = 0x4, scoped, tag = 'scoped memory for tpu_custom_call.1']
    #allocation4 [shape = 's32[1]{0}', space=sflag, size = 0x4, scoped, tag = 'scoped memory for tpu_custom_call.1']
    #allocation5 [shape = 'u8[65536]{0}', space=vmem, size = 0x10000, scoped, tag = 'input window, operand 1, single buffered']
    #allocation6 [shape = 's32[1]{0}', space=sflag, size = 0x4, scoped, tag = 'scoped memory for tpu_custom_call.1']
    #allocation7 [shape = 'u8[65536]{0}', space=vmem, size = 0x10000, scoped, tag = 'input window, operand 2, single buffered']
    #allocation8 [shape = 'u8[65536]{0}', space=vmem, size = 0x10000, scoped, tag = 'input window, operand 3, single buffered']
    #allocation9 [shape = 's32[1]{0}', space=sflag, size = 0x4, scoped, tag = 'scoped memory for tpu_custom_call.1']
    #allocation10 [shape = 'u8[8192]{0}', space=vmem, size = 0x2000, scoped, tag = 'output window, operand 0, single buffered']
    %9 = vsyncpa [#allocation3], 0
    %10 = vsyncpa [#allocation6], 0
    %11 = vsyncpa [#allocation9], 0
    %12 = vsyncpa [#allocation4], 0
    // Predicated region
    $region2: #{tpu_custom_call.1} parent=1 // pred_check
      _
    $region3: #{tpu_custom_call.1} parent=1 // pred_check_branch
      %14 = sbr.rel (0) target = $region5
    $region4: #{tpu_custom_call.1} parent=1 // pred_region
      %s16 = ssub.s32 256, 256
      %17 = vsyncadd [#allocation3], %s16
      %s18 = sshll.u32 [#allocation2], 4
      %s19 = int_to_ptr.vmem [resolvable:$true] %s18
      %24 = dma.hbm_to_vmem [thread:$0]  %s0, 256, %s19, [#allocation3], 128, 128, 8
    $region5: #{tpu_custom_call.1} parent=1 // pred_fallthru
      _
    // Predicated region
    $region6: #{tpu_custom_call.1} parent=1 // pred_check
      _
    $region7: #{tpu_custom_call.1} parent=1 // pred_check_branch
      %26 = sbr.rel (0) target = $region9
    $region8: #{tpu_custom_call.1} parent=1 // pred_region
      %s28 = ssub.s32 2048, 2048
      %29 = vsyncadd [#allocation6], %s28
      %s30 = sshll.u32 [#allocation5], 4
      %s31 = int_to_ptr.vmem [resolvable:$true] %s30
      %36 = dma.hbm_to_vmem [thread:$0]  %s1, 2048, %s31, [#allocation6], 128, 128, 8
    $region9: #{tpu_custom_call.1} parent=1 // pred_fallthru
      _
    // Predicated region
    $region10: #{tpu_custom_call.1} parent=1 // pred_check
      _
    $region11: #{tpu_custom_call.1} parent=1 // pred_check_branch
      %38 = sbr.rel (0) target = $region13
    $region12: #{tpu_custom_call.1} parent=1 // pred_region
      %s40 = ssub.s32 2048, 2048
      %41 = vsyncadd [#allocation6], %s40
      %s42 = sshll.u32 [#allocation7], 4
      %s43 = int_to_ptr.vmem [resolvable:$true] %s42
      %48 = dma.hbm_to_vmem [thread:$0]  %s2, 2048, %s43, [#allocation6], 128, 128, 8
    $region13: #{tpu_custom_call.1} parent=1 // pred_fallthru
      _
    // Predicated region
    $region14: #{tpu_custom_call.1} parent=1 // pred_check
      _
    $region15: #{tpu_custom_call.1} parent=1 // pred_check_branch
      %50 = sbr.rel (0) target = $region17
    $region16: #{tpu_custom_call.1} parent=1 // pred_region
      %s52 = ssub.s32 2048, 2048
      %53 = vsyncadd [#allocation9], %s52
      %s54 = sshll.u32 [#allocation8], 4
      %s55 = int_to_ptr.vmem [resolvable:$true] %s54
      %60 = dma.hbm_to_vmem [thread:$0]  %s3, 2048, %s55, [#allocation9], 128, 128, 8
    $region17: #{tpu_custom_call.1} parent=1 // pred_fallthru
      _
    // Predicated region
    $region18: #{tpu_custom_call.1} parent=1 // pred_check
      _
    $region19: #{tpu_custom_call.1} parent=1 // pred_check_branch
      %62 = sbr.rel (0) target = $region21
    $region20: #{tpu_custom_call.1} parent=1 // pred_region
      %63 = dma.done [#allocation3], 256
    $region21: #{tpu_custom_call.1} parent=1 // pred_fallthru
      _
    // Predicated region
    $region22: #{tpu_custom_call.1} parent=1 // pred_check
      _
    $region23: #{tpu_custom_call.1} parent=1 // pred_check_branch
      %65 = sbr.rel (0) target = $region25
    $region24: #{tpu_custom_call.1} parent=1 // pred_region
      %66 = dma.done [#allocation6], 2048
    $region25: #{tpu_custom_call.1} parent=1 // pred_fallthru
      _
    // Predicated region
    $region26: #{tpu_custom_call.1} parent=1 // pred_check
      _
    $region27: #{tpu_custom_call.1} parent=1 // pred_check_branch
      %68 = sbr.rel (0) target = $region29
    $region28: #{tpu_custom_call.1} parent=1 // pred_region
      %69 = dma.done [#allocation6], 2048
    $region29: #{tpu_custom_call.1} parent=1 // pred_fallthru
      _
    // Predicated region
    $region30: #{tpu_custom_call.1} parent=1 // pred_check
      _
    $region31: #{tpu_custom_call.1} parent=1 // pred_check_branch
      %71 = sbr.rel (0) target = $region33
    $region32: #{tpu_custom_call.1} parent=1 // pred_region
      %72 = dma.done [#allocation9], 2048
    $region33: #{tpu_custom_call.1} parent=1 // pred_fallthru
      _
    %v73 = vld [vmem:[#allocation2] sm:$0xff]
    %v74 = vld [vmem:[#allocation2 + $0x8] sm:$0xff]
    %v75 = vld [vmem:[#allocation5] sm:$0xff]
    %v76 = vld [vmem:[#allocation5 + $0x8] sm:$0xff]
    %v77 = vld [vmem:[#allocation5 + $0x10] sm:$0xff]
    %v78 = vld [vmem:[#allocation5 + $0x18] sm:$0xff]
    %v79 = vld [vmem:[#allocation5 + $0x20] sm:$0xff]
    %v80 = vld [vmem:[#allocation5 + $0x28] sm:$0xff]
    %v81 = vld [vmem:[#allocation5 + $0x30] sm:$0xff]
    %v82 = vld [vmem:[#allocation5 + $0x38] sm:$0xff]
    %v83 = vld [vmem:[#allocation5 + $0x40] sm:$0xff]
    %v84 = vld [vmem:[#allocation5 + $0x48] sm:$0xff]
    %v85 = vld [vmem:[#allocation5 + $0x50] sm:$0xff]
    %v86 = vld [vmem:[#allocation5 + $0x58] sm:$0xff]
    %v87 = vld [vmem:[#allocation5 + $0x60] sm:$0xff]
    %v88 = vld [vmem:[#allocation5 + $0x68] sm:$0xff]
    %v89 = vld [vmem:[#allocation5 + $0x70] sm:$0xff]
    %v90 = vld [vmem:[#allocation5 + $0x78] sm:$0xff]
    %v91 = vld [vmem:[#allocation7] sm:$0xff]
    %v92 = vld [vmem:[#allocation7 + $0x8] sm:$0xff]
    %v93 = vld [vmem:[#allocation7 + $0x10] sm:$0xff]
    %v94 = vld [vmem:[#allocation7 + $0x18] sm:$0xff]
    %v95 = vld [vmem:[#allocation7 + $0x20] sm:$0xff]
    %v96 = vld [vmem:[#allocation7 + $0x28] sm:$0xff]
    %v97 = vld [vmem:[#allocation7 + $0x30] sm:$0xff]
    %v98 = vld [vmem:[#allocation7 + $0x38] sm:$0xff]
    %v99 = vld [vmem:[#allocation7 + $0x40] sm:$0xff]
    %v100 = vld [vmem:[#allocation7 + $0x48] sm:$0xff]
    %v101 = vld [vmem:[#allocation7 + $0x50] sm:$0xff]
    %v102 = vld [vmem:[#allocation7 + $0x58] sm:$0xff]
    %v103 = vld [vmem:[#allocation7 + $0x60] sm:$0xff]
    %v104 = vld [vmem:[#allocation7 + $0x68] sm:$0xff]
    %v105 = vld [vmem:[#allocation7 + $0x70] sm:$0xff]
    %v106 = vld [vmem:[#allocation7 + $0x78] sm:$0xff]
    %107 = vmatprep.subr.mxu0 0.0
    %108 = vmatpush1.msra.mxu0 %v75
    %109 = vmatprep.subr.mxu0 0.0
    %110 = vmatpush1.msra.mxu0 %v76
    %111 = vmatprep.subr.mxu0 0.0
    %112 = vmatpush1.msra.mxu0 %v77
    %113 = vmatprep.subr.mxu0 0.0
    %114 = vmatpush1.msra.mxu0 %v78
    %115 = vmatprep.subr.mxu0 0.0
    %116 = vmatpush1.msra.mxu0 %v79
    %117 = vmatprep.subr.mxu0 0.0
    %118 = vmatpush1.msra.mxu0 %v80
    %119 = vmatprep.subr.mxu0 0.0
    %120 = vmatpush1.msra.mxu0 %v81
    %121 = vmatprep.subr.mxu0 0.0
    %122 = vmatpush1.msra.mxu0 %v82
    %123 = vmatprep.subr.mxu0 0.0
    %124 = vmatpush1.msra.mxu0 %v83
    %125 = vmatprep.subr.mxu0 0.0
    %126 = vmatpush1.msra.mxu0 %v84
    %127 = vmatprep.subr.mxu0 0.0
    %128 = vmatpush1.msra.mxu0 %v85
    %129 = vmatprep.subr.mxu0 0.0
    %130 = vmatpush1.msra.mxu0 %v86
    %131 = vmatprep.subr.mxu0 0.0
    %132 = vmatpush1.msra.mxu0 %v87
    %133 = vmatprep.subr.mxu0 0.0
    %134 = vmatpush1.msra.mxu0 %v88
    %135 = vmatprep.subr.mxu0 0.0
    %136 = vmatpush1.msra.mxu0 %v89
    %137 = vmatprep.subr.mxu0 0.0
    %138 = vmatpush1.msra.mxu0 %v90
    %139 = vmatprep.subr.mxu0 0.0
    %140 = vmatpush1.msra.mxu0 0.0
    %141 = vmatprep.subr.mxu0 0.0
    %142 = vmatpush1.msra.mxu0 0.0
    %143 = vmatprep.subr.mxu0 0.0
    %144 = vmatpush1.msra.mxu0 0.0
    %145 = vmatprep.subr.mxu0 0.0
    %146 = vmatpush1.msra.mxu0 0.0
    %147 = vmatprep.subr.mxu0 0.0
    %148 = vmatpush1.msra.mxu0 0.0
    %149 = vmatprep.subr.mxu0 0.0
    %150 = vmatpush1.msra.mxu0 0.0
    %151 = vmatprep.subr.mxu0 0.0
    %152 = vmatpush1.msra.mxu0 0.0
    %153 = vmatprep.subr.mxu0 0.0
    %154 = vmatpush1.msra.mxu0 0.0
    %155 = vmatprep.subr.mxu0 0.0
    %156 = vmatpush1.msra.mxu0 0.0
    %157 = vmatprep.subr.mxu0 0.0
    %158 = vmatpush1.msra.mxu0 0.0
    %159 = vmatprep.subr.mxu0 0.0
    %160 = vmatpush1.msra.mxu0 0.0
    %161 = vmatprep.subr.mxu0 0.0
    %162 = vmatpush1.msra.mxu0 0.0
    %163 = vmatprep.subr.mxu0 0.0
    %164 = vmatpush1.msra.mxu0 0.0
    %165 = vmatprep.subr.mxu0 0.0
    %166 = vmatpush1.msra.mxu0 0.0
    %167 = vmatprep.subr.mxu0 0.0
    %168 = vmatpush1.msra.mxu0 0.0
    %169 = vmatprep.subr.mxu0 0.0
    %170 = vmatpush1.msra.mxu0 0.0
    %171 = vmatprep.mubr.f32.mxu0 0.0
    %172 = vmatmul.mubr.f32.gmra.mrb[0].mxu0 %v73
    %v173 = vpop.f32.mrb[0].mxu0
    %v174 = vadd.f32 0.0, %v173
    %v175 = vpop.f32.mrb[0].mxu0
    %176 = vmatprep.mubr.f32.mxu0 0.0
    %177 = vmatmul.mubr.f32.gmra.mrb[0].mxu0 %v74
    %v178 = vpop.f32.mrb[0].mxu0
    %v179 = vadd.f32 0.0, %v178
    %v180 = vpop.f32.mrb[0].mxu0
    %181 = vdwg.mxu0
    %182 = vmatprep.subr.mxu0 0.0
    %183 = vmatpush1.msra.mxu0 %v91
    %184 = vmatprep.subr.mxu0 0.0
    %185 = vmatpush1.msra.mxu0 %v92
    %186 = vmatprep.subr.mxu0 0.0
    %187 = vmatpush1.msra.mxu0 %v93
    %188 = vmatprep.subr.mxu0 0.0
    %189 = vmatpush1.msra.mxu0 %v94
    %190 = vmatprep.subr.mxu0 0.0
    %191 = vmatpush1.msra.mxu0 %v95
    %192 = vmatprep.subr.mxu0 0.0
    %193 = vmatpush1.msra.mxu0 %v96
    %194 = vmatprep.subr.mxu0 0.0
    %195 = vmatpush1.msra.mxu0 %v97
    %196 = vmatprep.subr.mxu0 0.0
    %197 = vmatpush1.msra.mxu0 %v98
    %198 = vmatprep.subr.mxu0 0.0
    %199 = vmatpush1.msra.mxu0 %v99
    %200 = vmatprep.subr.mxu0 0.0
    %201 = vmatpush1.msra.mxu0 %v100
    %202 = vmatprep.subr.mxu0 0.0
    %203 = vmatpush1.msra.mxu0 %v101
    %204 = vmatprep.subr.mxu0 0.0
    %205 = vmatpush1.msra.mxu0 %v102
    %206 = vmatprep.subr.mxu0 0.0
    %207 = vmatpush1.msra.mxu0 %v103
    %208 = vmatprep.subr.mxu0 0.0
    %209 = vmatpush1.msra.mxu0 %v104
    %210 = vmatprep.subr.mxu0 0.0
    %211 = vmatpush1.msra.mxu0 %v105
    %212 = vmatprep.subr.mxu0 0.0
    %213 = vmatpush1.msra.mxu0 %v106
    %214 = vmatprep.subr.mxu0 0.0
    %215 = vmatpush1.msra.mxu0 0.0
    %216 = vmatprep.subr.mxu0 0.0
    %217 = vmatpush1.msra.mxu0 0.0
    %218 = vmatprep.subr.mxu0 0.0
    %219 = vmatpush1.msra.mxu0 0.0
    %220 = vmatprep.subr.mxu0 0.0
    %221 = vmatpush1.msra.mxu0 0.0
    %222 = vmatprep.subr.mxu0 0.0
    %223 = vmatpush1.msra.mxu0 0.0
    %224 = vmatprep.subr.mxu0 0.0
    %225 = vmatpush1.msra.mxu0 0.0
    %226 = vmatprep.subr.mxu0 0.0
    %227 = vmatpush1.msra.mxu0 0.0
    %228 = vmatprep.subr.mxu0 0.0
    %229 = vmatpush1.msra.mxu0 0.0
    %230 = vmatprep.subr.mxu0 0.0
    %231 = vmatpush1.msra.mxu0 0.0
    %232 = vmatprep.subr.mxu0 0.0
    %233 = vmatpush1.msra.mxu0 0.0
    %234 = vmatprep.subr.mxu0 0.0
    %235 = vmatpush1.msra.mxu0 0.0
    %236 = vmatprep.subr.mxu0 0.0
    %237 = vmatpush1.msra.mxu0 0.0
    %238 = vmatprep.subr.mxu0 0.0
    %239 = vmatpush1.msra.mxu0 0.0
    %240 = vmatprep.subr.mxu0 0.0
    %241 = vmatpush1.msra.mxu0 0.0
    %242 = vmatprep.subr.mxu0 0.0
    %243 = vmatpush1.msra.mxu0 0.0
    %244 = vmatprep.subr.mxu0 0.0
    %245 = vmatpush1.msra.mxu0 0.0
    %246 = vmatprep.mubr.f32.mxu0 0.0
    %247 = vmatmul.mubr.f32.gmra.mrb[0].mxu0 %v73
    %v248 = vpop.f32.mrb[0].mxu0
    %v249 = vadd.f32 0.0, %v248
    %v250 = vpop.f32.mrb[0].mxu0
    %251 = vmatprep.mubr.f32.mxu0 0.0
    %252 = vmatmul.mubr.f32.gmra.mrb[0].mxu0 %v74
    %v253 = vpop.f32.mrb[0].mxu0
    %v254 = vadd.f32 0.0, %v253
    %v255 = vpop.f32.mrb[0].mxu0
    %256 = vdwg.mxu0
    %v257 = vxor.u32 %v174, 2147483648
    %v258 = vxor.u32 %v179, 2147483648
    %v259 = vmul.f32 %v257, 1.442695
    %v260 = vpow.pop %v259
    %v261 = vmul.f32 %v258, 1.442695
    %v262 = vpow.pop %v261
    %v263 = vadd.f32 %v260, 1.0
    %v264 = vadd.f32 %v262, 1.0
    %v265 = vrcp.pop %v263
    %v266 = vmul.f32 1.0, %v265
    %v267 = vrcp.pop %v264
    %v268 = vmul.f32 1.0, %v267
    %v269 = vmul.f32 %v174, %v266
    %v270 = vmul.f32 %v179, %v268
    %v271 = vmul.f32 %v269, %v249
    %v272 = vmul.f32 %v270, %v254
    %v273 = vld [vmem:[#allocation8] sm:$0xff]
    %v274 = vld [vmem:[#allocation8 + $0x8] sm:$0xff]
    %v275 = vld [vmem:[#allocation8 + $0x10] sm:$0xff]
    %v276 = vld [vmem:[#allocation8 + $0x18] sm:$0xff]
    %v277 = vld [vmem:[#allocation8 + $0x20] sm:$0xff]
    %v278 = vld [vmem:[#allocation8 + $0x28] sm:$0xff]
    %v279 = vld [vmem:[#allocation8 + $0x30] sm:$0xff]
    %v280 = vld [vmem:[#allocation8 + $0x38] sm:$0xff]
    %v281 = vld [vmem:[#allocation8 + $0x40] sm:$0xff]
    %v282 = vld [vmem:[#allocation8 + $0x48] sm:$0xff]
    %v283 = vld [vmem:[#allocation8 + $0x50] sm:$0xff]
    %v284 = vld [vmem:[#allocation8 + $0x58] sm:$0xff]
    %v285 = vld [vmem:[#allocation8 + $0x60] sm:$0xff]
    %v286 = vld [vmem:[#allocation8 + $0x68] sm:$0xff]
    %v287 = vld [vmem:[#allocation8 + $0x70] sm:$0xff]
    %v288 = vld [vmem:[#allocation8 + $0x78] sm:$0xff]
    %289 = vmatprep.subr.mxu0 0.0
    %290 = vmatpush1.msra.mxu0 %v273
    %291 = vmatprep.subr.mxu0 0.0
    %292 = vmatpush1.msra.mxu0 %v274
    %293 = vmatprep.subr.mxu0 0.0
    %294 = vmatpush1.msra.mxu0 %v275
    %295 = vmatprep.subr.mxu0 0.0
    %296 = vmatpush1.msra.mxu0 %v276
    %297 = vmatprep.subr.mxu0 0.0
    %298 = vmatpush1.msra.mxu0 %v277
    %299 = vmatprep.subr.mxu0 0.0
    %300 = vmatpush1.msra.mxu0 %v278
    %301 = vmatprep.subr.mxu0 0.0
    %302 = vmatpush1.msra.mxu0 %v279
    %303 = vmatprep.subr.mxu0 0.0
    %304 = vmatpush1.msra.mxu0 %v280
    %305 = vmatprep.subr.mxu0 0.0
    %306 = vmatpush1.msra.mxu0 %v281
    %307 = vmatprep.subr.mxu0 0.0
    %308 = vmatpush1.msra.mxu0 %v282
    %309 = vmatprep.subr.mxu0 0.0
    %310 = vmatpush1.msra.mxu0 %v283
    %311 = vmatprep.subr.mxu0 0.0
    %312 = vmatpush1.msra.mxu0 %v284
    %313 = vmatprep.subr.mxu0 0.0
    %314 = vmatpush1.msra.mxu0 %v285
    %315 = vmatprep.subr.mxu0 0.0
    %316 = vmatpush1.msra.mxu0 %v286
    %317 = vmatprep.subr.mxu0 0.0
    %318 = vmatpush1.msra.mxu0 %v287
    %319 = vmatprep.subr.mxu0 0.0
    %320 = vmatpush1.msra.mxu0 %v288
    %321 = vmatprep.subr.mxu0 0.0
    %322 = vmatpush1.msra.mxu0 0.0
    %323 = vmatprep.subr.mxu0 0.0
    %324 = vmatpush1.msra.mxu0 0.0
    %325 = vmatprep.subr.mxu0 0.0
    %326 = vmatpush1.msra.mxu0 0.0
    %327 = vmatprep.subr.mxu0 0.0
    %328 = vmatpush1.msra.mxu0 0.0
    %329 = vmatprep.subr.mxu0 0.0
    %330 = vmatpush1.msra.mxu0 0.0
    %331 = vmatprep.subr.mxu0 0.0
    %332 = vmatpush1.msra.mxu0 0.0
    %333 = vmatprep.subr.mxu0 0.0
    %334 = vmatpush1.msra.mxu0 0.0
    %335 = vmatprep.subr.mxu0 0.0
    %336 = vmatpush1.msra.mxu0 0.0
    %337 = vmatprep.subr.mxu0 0.0
    %338 = vmatpush1.msra.mxu0 0.0
    %339 = vmatprep.subr.mxu0 0.0
    %340 = vmatpush1.msra.mxu0 0.0
    %341 = vmatprep.subr.mxu0 0.0
    %342 = vmatpush1.msra.mxu0 0.0
    %343 = vmatprep.subr.mxu0 0.0
    %344 = vmatpush1.msra.mxu0 0.0
    %345 = vmatprep.subr.mxu0 0.0
    %346 = vmatpush1.msra.mxu0 0.0
    %347 = vmatprep.subr.mxu0 0.0
    %348 = vmatpush1.msra.mxu0 0.0
    %349 = vmatprep.subr.mxu0 0.0
    %350 = vmatpush1.msra.mxu0 0.0
    %351 = vmatprep.subr.mxu0 0.0
    %352 = vmatpush1.msra.mxu0 0.0
    %353 = vmatprep.mubr.f32.mxu0 0.0
    %354 = vmatmul.mubr.f32.gmra.mrb[0].mxu0 %v271
    %v355 = vpop.f32.mrb[0].mxu0
    %v356 = vadd.f32 0.0, %v355
    %v357 = vpop.f32.mrb[0].mxu0
    %358 = vmatprep.mubr.f32.mxu0 0.0
    %359 = vmatmul.mubr.f32.gmra.mrb[0].mxu0 %v272
    %v360 = vpop.f32.mrb[0].mxu0
    %v361 = vadd.f32 0.0, %v360
    %v362 = vpop.f32.mrb[0].mxu0
    %363 = vdwg.mxu0
    %364 = vst [vmem:[#allocation10] sm:$0xff] %v356
    %365 = vst [vmem:[#allocation10 + $0x8] sm:$0xff] %v361
    // Predicated region
    $region34: #{tpu_custom_call.1} parent=1 // pred_check
      _
    $region35: #{tpu_custom_call.1} parent=1 // pred_check_branch
      %367 = sbr.rel (0) target = $region37
    $region36: #{tpu_custom_call.1} parent=1 // pred_region
      %s369 = ssub.s32 256, 256
      %370 = vsyncadd [#allocation4], %s369
      %s371 = sshll.u32 [#allocation10], 4
      %s372 = int_to_ptr.vmem [resolvable:$true] %s371
      %377 = dma.vmem_to_hbm [thread:$0]  %s372, 256, %s4, [#allocation4], 128, 128, 8
    $region37: #{tpu_custom_call.1} parent=1 // pred_fallthru
      _
    // Predicated region
    $region38: #{tpu_custom_call.1} parent=1 // pred_check
      _
    $region39: #{tpu_custom_call.1} parent=1 // pred_check_branch
      %379 = sbr.rel (0) target = $region41
    $region40: #{tpu_custom_call.1} parent=1 // pred_region
      %380 = dma.done [#allocation4], 256
    $region41: #{tpu_custom_call.1} parent=1 // pred_fallthru
      _
    %381 = vsyncpa [#allocation3], 1
    %382 = vsyncpa [#allocation6], 1
    %383 = vsyncpa [#allocation9], 1
    %384 = vsyncpa [#allocation4], 1

</llo_original>
